<compile_context>
chip_gen: v7x
topology: tpu7x:2x2x1
jax: 0.10.0
libtpu: 0.0.40
codegen_flags: <defaults>
</compile_context>

<pallas_src>
import functools
import math

import jax
import jax.numpy as jnp
import numpy as np
from jax.experimental import pallas as pl
from jax.experimental.pallas import tpu as pltpu

NAN_PLACEHOLDER = -2.0
PER_PIXEL_WEIGHT = 1.0
TV_WEIGHT = 0.1


# -------------------------------- kernel -----------------------------------
def _loss_kernel(pred_ref, targ_ref, mask_ref, out_ref, *, nan_ph, wp, g, rpi):
    pred = pred_ref[...]                        # (TR, 128) f32
    targ = targ_ref[...]                        # (TR, 128) f32
    mval = mask_ref[...].astype(jnp.float32)    # (TR, 128)  1.0 == True (unmasked)

    tr = pred.shape[0]
    row = jax.lax.broadcasted_iota(jnp.int32, (tr, 128), 0)
    lane = jax.lax.broadcasted_iota(jnp.int32, (tr, 128), 1)

    shift_amt = wp.bit_length() - 1             # wp is a power of two
    c = lane & (wp - 1)                         # column inside an image row
    rr = lane >> shift_amt                      # row-within-lane-row, 0..g-1
    if (rpi & (rpi - 1)) == 0:                  # rpi power of two -> bitwise
        rowmod = row & (rpi - 1)
    else:                                       # general rpi: exact float trick
        rf = row.astype(jnp.float32)
        q = jnp.floor((rf + 0.5) / float(rpi)).astype(jnp.int32)
        rowmod = row - q * rpi

    not_h0 = jnp.logical_not(jnp.logical_and(rowmod == 0, rr == 0))          # h >= 1
    not_hlast = jnp.logical_not(jnp.logical_and(rowmod == rpi - 1, rr == g - 1))
    c_ge1 = c >= 1
    c_lt_last = c <= wp - 2
    rr_ge1 = rr >= 1
    rr_lt_last = rr <= g - 2

    def lane_roll(x, s):
        s = s % 128
        return x if s == 0 else pltpu.roll(x, s, axis=1)

    def prev_lane_row(x):                       # y[r] = x[r-1]
        if tr == 1:
            return jnp.zeros_like(x)
        return jnp.concatenate([jnp.zeros((1, 128), x.dtype), x[:-1, :]], axis=0)

    def next_lane_row(x):                       # y[r] = x[r+1]
        if tr == 1:
            return jnp.zeros_like(x)
        return jnp.concatenate([x[1:, :], jnp.zeros((1, 128), x.dtype)], axis=0)

    def shift_up(x):                            # y(h,w) = x(h-1,w), 0 at h==0
        a = lane_roll(x, wp)
        b = lane_roll(prev_lane_row(x), wp)
        return jnp.where(not_h0, jnp.where(rr_ge1, a, b), 0.0)

    def shift_down(x):                          # y(h,w) = x(h+1,w), 0 at h==Hp-1
        a = lane_roll(x, 128 - wp)
        b = lane_roll(next_lane_row(x), 128 - wp)
        return jnp.where(not_hlast, jnp.where(rr_lt_last, a, b), 0.0)

    def shift_left(x):                          # y(h,w) = x(h,w-1), 0 at w==0
        return jnp.where(c_ge1, lane_roll(x, 1), 0.0)

    def shift_right(x):                         # y(h,w) = x(h,w+1), 0 at w==Wp-1
        return jnp.where(c_lt_last, lane_roll(x, 127), 0.0)

    # --- PerPixelMSE (including the in-place masks |= (target == nan)) ---
    nan_t = (targ == nan_ph).astype(jnp.float32)
    m1 = jnp.maximum(mval, nan_t)               # masks | nan_mask
    inv_m = 1.0 - m1
    pp_field = (pred - targ) * (pred - targ) * inv_m

    # --- 3x3 dilation of ~m1 (== conv2d(ones 3x3, padding=1) > 0.5) ---
    rmax = jnp.maximum(inv_m, shift_up(inv_m))
    rmax = jnp.maximum(rmax, shift_down(inv_m))
    dil = jnp.maximum(rmax, shift_left(rmax))
    dil = jnp.maximum(dil, shift_right(rmax))   # exactly 0/1

    # --- TotalVariationLoss on the composed image ---
    img = jnp.where(dil > 0.5, pred, targ)
    mask2 = jnp.where(pred == nan_ph, 0.0, dil)

    m2_up = shift_up(mask2)
    m2_lf = shift_left(mask2)
    img_up = shift_up(img)
    img_lf = shift_left(img)

    valid_x = mask2 * m2_up
    valid_y = mask2 * m2_lf
    n_field = valid_x + valid_y
    tv_field = jnp.abs(img - img_up) * valid_x + jnp.abs(img - img_lf) * valid_y

    zrow = jnp.zeros((1, 128), jnp.float32)

    def bc(s):                                  # broadcast scalar -> (1, 128)
        return zrow + s

    out_ref[0] = jnp.concatenate(
        [bc(jnp.sum(pp_field)), bc(jnp.sum(dil)),
         bc(jnp.sum(n_field)), bc(jnp.sum(tv_field))], axis=0)


# -------------------------------- wrapper -----------------------------------
def custom_loss1(prediction, target, masks,
                 nan_placeholder=NAN_PLACEHOLDER,
                 per_pixel_weight=PER_PIXEL_WEIGHT,
                 tv_weight=TV_WEIGHT):
    B, C, H, W = prediction.shape
    N = B * C
    if W > 128:
        # TODO(synk): add a lane-tiling path for W > 128 (row spans several lane rows).
        raise NotImplementedError("custom_loss1 Pallas kernel requires W <= 128")

    nan_ph = float(nan_placeholder)
    predf = prediction.reshape(N, H, W).astype(jnp.float32)
    targf = target.reshape(N, H, W).astype(jnp.float32)
    maskf = masks.reshape(N, H, W)              # bool

    Wp = int(pl.next_power_of_2(max(W, 1)))     # divisor of 128
    G = 128 // Wp                               # image rows per 128-lane row
    Hp = int(pl.cdiv(H, G)) * G
    if Wp != W or Hp != H:                      # pad so Hp*Wp is a multiple of 128
        pw = ((0, 0), (0, Hp - H), (0, Wp - W))
        predf = jnp.pad(predf, pw, constant_values=nan_ph)   # nan -> inert in TV mask
        targf = jnp.pad(targf, pw, constant_values=0.0)
        maskf = jnp.pad(maskf, pw, constant_values=True)     # True -> no pp / no dilation
    rpi = Hp // G                               # lane rows per image
    R = N * rpi

    # lane-dense 2-D view (free, row-major contiguous reshape)
    pred2 = predf.reshape(R, 128)
    targ2 = targf.reshape(R, 128)
    mask2 = maskf.reshape(R, 128).astype(jnp.bfloat16)        # halve mask HBM traffic

    rows_target = 2048                          # ~1 MiB f32 per input block
    if R <= rows_target:
        TR = R                                  # single block == full array: always legal
    else:
        unit = (rpi * 16) // math.gcd(rpi, 16)  # whole images AND (16,128) tiling friendly
        TR = max(unit, (rows_target // unit) * unit)
    NB = int(pl.cdiv(R, TR))
    Rp = NB * TR
    if Rp != R:                                 # pad with inert rows (mask=True)
        pr = ((0, Rp - R), (0, 0))
        pred2 = jnp.pad(pred2, pr, constant_values=nan_ph)
        targ2 = jnp.pad(targ2, pr, constant_values=0.0)
        mask2 = jnp.pad(mask2, pr, constant_values=1.0)

    kernel = functools.partial(_loss_kernel, nan_ph=nan_ph, wp=Wp, g=G, rpi=rpi)

    partials = pl.pallas_call(
        kernel,
        out_shape=jax.ShapeDtypeStruct((NB, 4, 128), jnp.float32),
        grid=(NB,),
        in_specs=[
            pl.BlockSpec((TR, 128), lambda i: (i, 0)),
            pl.BlockSpec((TR, 128), lambda i: (i, 0)),
            pl.BlockSpec((TR, 128), lambda i: (i, 0)),
        ],
        out_specs=pl.BlockSpec((1, 4, 128), lambda i: (i, 0, 0)),
        compiler_params=pltpu.CompilerParams(
            dimension_semantics=("parallel",),
            vmem_limit_bytes=32 * 1024 * 1024),
    )(pred2, targ2, mask2)

    totals = jnp.sum(partials[:, :, 0], axis=0)               # (4,)
    pp_sum, dil_sum, n_diffs, abs_sum = totals[0], totals[1], totals[2], totals[3]
    # torch early-returns 0.0 for the TV loss if the dilated mask is all-zero.
    tv = jnp.where(dil_sum == 0, jnp.float32(0.0), abs_sum / n_diffs)
    return per_pixel_weight * pp_sum + tv_weight * tv


# ------------------------- pure-JAX reference (check) -----------------------
def _reference(prediction, target, masks, nan_ph, ppw, tvw):
    nan_t = target == nan_ph
    m1 = masks | nan_t
    pp = jnp.sum(jnp.where(m1, 0.0, (prediction - target) ** 2))

    f = (~m1).astype(jnp.float32)
    fp = jnp.pad(f, ((0, 0), (0, 0), (1, 1), (1, 1)))
    H, W = f.shape[2], f.shape[3]
    dil = jnp.zeros_like(f)
    for dy in range(3):
        for dx in range(3):
            dil = jnp.maximum(dil, fp[:, :, dy:dy + H, dx:dx + W])
    dilated = dil > 0.5
    dil_sum = jnp.sum(dilated.astype(jnp.float32))

    img = jnp.where(dilated, prediction, target)
    mask2 = (dilated & ~(prediction == nan_ph)).astype(jnp.float32)
    valid_x = mask2[:, :, 1:, :] * mask2[:, :, :-1, :]
    valid_y = mask2[:, :, :, 1:] * mask2[:, :, :, :-1]
    n = valid_x.sum() + valid_y.sum()
    dr = jnp.abs(img[:, :, 1:, :] - img[:, :, :-1, :]) * valid_x
    dc = jnp.abs(img[:, :, :, 1:] - img[:, :, :, :-1]) * valid_y
    tv = jnp.where(dil_sum == 0, 0.0, (dr.sum() + dc.sum()) / n)
    return ppw * pp + tvw * tv


# ---------------------------------- main ------------------------------------
if __name__ == "__main__":
    B, C, H, W = 2, 4, 16, 16
    key = jax.random.PRNGKey(0)
    k1, k2, k3, k4, k5 = jax.random.split(key, 5)

    pred = jax.random.normal(k1, (B, C, H, W), jnp.float32)
    pred = jnp.where(jax.random.uniform(k2, (B, C, H, W)) < 0.05,
                     NAN_PLACEHOLDER, pred)
    targ = jax.random.normal(k3, (B, C, H, W), jnp.float32)
    targ = jnp.where(jax.random.uniform(k4, (B, C, H, W)) < 0.10,
                     NAN_PLACEHOLDER, targ)
    masks = jax.random.uniform(k5, (B, C, H, W)) > 0.5   # bool, False = masked

    loss = custom_loss1(pred, targ, masks)
    jax.block_until_ready(loss)

    ref = _reference(pred, targ, masks, NAN_PLACEHOLDER,
                     PER_PIXEL_WEIGHT, TV_WEIGHT)
    np.testing.assert_allclose(np.asarray(loss), np.asarray(ref),
                               rtol=2e-5, atol=1e-5)
    print("KERNEL_OK")
</pallas_src>

<mosaic_0001>
module attributes {stable_mosaic.version = 11 : i64} {
  func.func @_loss_kernel(%arg0: i32, %arg1: memref<16x128xf32, #tpu.memory_space<vmem>>, %arg2: memref<16x128xf32, #tpu.memory_space<vmem>>, %arg3: memref<16x128xbf16, #tpu.memory_space<vmem>>, %arg4: memref<1x4x128xf32, #tpu.memory_space<vmem>>) attributes {dimension_semantics = [#tpu.dimension_semantics<parallel>], iteration_bounds = array<i64: 1>, scalar_prefetch = 0 : i64, scratch_operands = 0 : i64, tpu.core_type = #tpu.core_type<tc>, window_params = [{transform_indices = @transform_0, window_bounds = array<i64: 16, 128>}, {transform_indices = @transform_1, window_bounds = array<i64: 16, 128>}, {transform_indices = @transform_2, window_bounds = array<i64: 16, 128>}, {transform_indices = @transform_3, window_bounds = array<i64: 1, 4, 128>}]} {
    %c0 = arith.constant 0 : index
    %c0_0 = arith.constant 0 : index
    %0 = vector.load %arg1[%c0, %c0_0] : memref<16x128xf32, #tpu.memory_space<vmem>>, vector<16x128xf32>
    %c0_1 = arith.constant 0 : index
    %c0_2 = arith.constant 0 : index
    %1 = vector.load %arg2[%c0_1, %c0_2] : memref<16x128xf32, #tpu.memory_space<vmem>>, vector<16x128xf32>
    %c0_3 = arith.constant 0 : index
    %c0_4 = arith.constant 0 : index
    %2 = vector.load %arg3[%c0_3, %c0_4] : memref<16x128xbf16, #tpu.memory_space<vmem>>, vector<16x128xbf16>
    %3 = arith.extf %2 : vector<16x128xbf16> to vector<16x128xf32>
    %4 = tpu.iota {dimensions = array<i32: 0>} : vector<16x128xi32>
    %5 = tpu.iota {dimensions = array<i32: 1>} : vector<16x128xi32>
    %c15_i32 = arith.constant 15 : i32
    %6 = vector.broadcast %c15_i32 : i32 to vector<16x128xi32>
    %7 = arith.andi %5, %6 : vector<16x128xi32>
    %c4_i32 = arith.constant 4 : i32
    %8 = vector.broadcast %c4_i32 : i32 to vector<16x128xi32>
    %9 = arith.shrsi %5, %8 : vector<16x128xi32>
    %c1_i32 = arith.constant 1 : i32
    %10 = vector.broadcast %c1_i32 : i32 to vector<16x128xi32>
    %11 = arith.andi %4, %10 : vector<16x128xi32>
    %c0_i32 = arith.constant 0 : i32
    %12 = vector.broadcast %c0_i32 : i32 to vector<16x128xi32>
    %13 = arith.cmpi eq, %11, %12 : vector<16x128xi32>
    %c0_i32_5 = arith.constant 0 : i32
    %14 = vector.broadcast %c0_i32_5 : i32 to vector<16x128xi32>
    %15 = arith.cmpi eq, %9, %14 : vector<16x128xi32>
    %16 = arith.andi %13, %15 : vector<16x128xi1>
    %cst = arith.constant dense<true> : vector<16x128xi1>
    %17 = arith.xori %16, %cst : vector<16x128xi1>
    %c1_i32_6 = arith.constant 1 : i32
    %18 = vector.broadcast %c1_i32_6 : i32 to vector<16x128xi32>
    %19 = arith.cmpi eq, %11, %18 : vector<16x128xi32>
    %c7_i32 = arith.constant 7 : i32
    %20 = vector.broadcast %c7_i32 : i32 to vector<16x128xi32>
    %21 = arith.cmpi eq, %9, %20 : vector<16x128xi32>
    %22 = arith.andi %19, %21 : vector<16x128xi1>
    %cst_7 = arith.constant dense<true> : vector<16x128xi1>
    %23 = arith.xori %22, %cst_7 : vector<16x128xi1>
    %c1_i32_8 = arith.constant 1 : i32
    %24 = vector.broadcast %c1_i32_8 : i32 to vector<16x128xi32>
    %25 = arith.cmpi sge, %7, %24 : vector<16x128xi32>
    %c14_i32 = arith.constant 14 : i32
    %26 = vector.broadcast %c14_i32 : i32 to vector<16x128xi32>
    %27 = arith.cmpi sle, %7, %26 : vector<16x128xi32>
    %c1_i32_9 = arith.constant 1 : i32
    %28 = vector.broadcast %c1_i32_9 : i32 to vector<16x128xi32>
    %29 = arith.cmpi sge, %9, %28 : vector<16x128xi32>
    %c6_i32 = arith.constant 6 : i32
    %30 = vector.broadcast %c6_i32 : i32 to vector<16x128xi32>
    %31 = arith.cmpi sle, %9, %30 : vector<16x128xi32>
    %cst_10 = arith.constant -2.000000e+00 : f32
    %32 = vector.broadcast %cst_10 : f32 to vector<16x128xf32>
    %33 = arith.cmpf oeq, %1, %32 : vector<16x128xf32>
    %34 = arith.extui %33 : vector<16x128xi1> to vector<16x128xi32>
    %35 = arith.sitofp %34 : vector<16x128xi32> to vector<16x128xf32>
    %36 = arith.maximumf %3, %35 : vector<16x128xf32>
    %cst_11 = arith.constant 1.000000e+00 : f32
    %37 = vector.broadcast %cst_11 : f32 to vector<16x128xf32>
    %38 = arith.subf %37, %36 : vector<16x128xf32>
    %39 = arith.subf %0, %1 : vector<16x128xf32>
    %40 = arith.subf %0, %1 : vector<16x128xf32>
    %41 = arith.mulf %39, %40 : vector<16x128xf32>
    %42 = arith.mulf %41, %38 : vector<16x128xf32>
    %c16_i32 = arith.constant 16 : i32
    %43 = tpu.dynamic_rotate %38 by %c16_i32 dim 1 : vector<16x128xf32>, i32 -> vector<16x128xf32>
    %cst_12 = arith.constant 0.000000e+00 : f32
    %44 = vector.broadcast %cst_12 : f32 to vector<1x128xf32>
    %45 = vector.extract_strided_slice %38 {offsets = [0, 0], sizes = [15, 128], strides = [1, 1]} : vector<16x128xf32> to vector<15x128xf32>
    %46 = tpu.concatenate %44, %45 in 0 : vector<1x128xf32>, vector<15x128xf32> -> vector<16x128xf32>
    %c16_i32_13 = arith.constant 16 : i32
    %47 = tpu.dynamic_rotate %46 by %c16_i32_13 dim 1 : vector<16x128xf32>, i32 -> vector<16x128xf32>
    %48 = arith.select %29, %43, %47 : vector<16x128xi1>, vector<16x128xf32>
    %cst_14 = arith.constant 0.000000e+00 : f32
    %49 = vector.broadcast %cst_14 : f32 to vector<16x128xf32>
    %50 = arith.select %17, %48, %49 : vector<16x128xi1>, vector<16x128xf32>
    %51 = arith.maximumf %38, %50 : vector<16x128xf32>
    %c112_i32 = arith.constant 112 : i32
    %52 = tpu.dynamic_rotate %38 by %c112_i32 dim 1 : vector<16x128xf32>, i32 -> vector<16x128xf32>
    %53 = vector.extract_strided_slice %38 {offsets = [1, 0], sizes = [15, 128], strides = [1, 1]} : vector<16x128xf32> to vector<15x128xf32>
    %cst_15 = arith.constant 0.000000e+00 : f32
    %54 = vector.broadcast %cst_15 : f32 to vector<1x128xf32>
    %55 = tpu.concatenate %53, %54 in 0 : vector<15x128xf32>, vector<1x128xf32> -> vector<16x128xf32>
    %c112_i32_16 = arith.constant 112 : i32
    %56 = tpu.dynamic_rotate %55 by %c112_i32_16 dim 1 : vector<16x128xf32>, i32 -> vector<16x128xf32>
    %57 = arith.select %31, %52, %56 : vector<16x128xi1>, vector<16x128xf32>
    %cst_17 = arith.constant 0.000000e+00 : f32
    %58 = vector.broadcast %cst_17 : f32 to vector<16x128xf32>
    %59 = arith.select %23, %57, %58 : vector<16x128xi1>, vector<16x128xf32>
    %60 = arith.maximumf %51, %59 : vector<16x128xf32>
    %c1_i32_18 = arith.constant 1 : i32
    %61 = tpu.dynamic_rotate %60 by %c1_i32_18 dim 1 : vector<16x128xf32>, i32 -> vector<16x128xf32>
    %cst_19 = arith.constant 0.000000e+00 : f32
    %62 = vector.broadcast %cst_19 : f32 to vector<16x128xf32>
    %63 = arith.select %25, %61, %62 : vector<16x128xi1>, vector<16x128xf32>
    %64 = arith.maximumf %60, %63 : vector<16x128xf32>
    %c127_i32 = arith.constant 127 : i32
    %65 = tpu.dynamic_rotate %60 by %c127_i32 dim 1 : vector<16x128xf32>, i32 -> vector<16x128xf32>
    %cst_20 = arith.constant 0.000000e+00 : f32
    %66 = vector.broadcast %cst_20 : f32 to vector<16x128xf32>
    %67 = arith.select %27, %65, %66 : vector<16x128xi1>, vector<16x128xf32>
    %68 = arith.maximumf %64, %67 : vector<16x128xf32>
    %cst_21 = arith.constant 5.000000e-01 : f32
    %69 = vector.broadcast %cst_21 : f32 to vector<16x128xf32>
    %70 = arith.cmpf ogt, %68, %69 : vector<16x128xf32>
    %71 = arith.select %70, %0, %1 : vector<16x128xi1>, vector<16x128xf32>
    %cst_22 = arith.constant -2.000000e+00 : f32
    %72 = vector.broadcast %cst_22 : f32 to vector<16x128xf32>
    %73 = arith.cmpf oeq, %0, %72 : vector<16x128xf32>
    %cst_23 = arith.constant 0.000000e+00 : f32
    %74 = vector.broadcast %cst_23 : f32 to vector<16x128xf32>
    %75 = arith.select %73, %74, %68 : vector<16x128xi1>, vector<16x128xf32>
    %c16_i32_24 = arith.constant 16 : i32
    %76 = tpu.dynamic_rotate %75 by %c16_i32_24 dim 1 : vector<16x128xf32>, i32 -> vector<16x128xf32>
    %cst_25 = arith.constant 0.000000e+00 : f32
    %77 = vector.broadcast %cst_25 : f32 to vector<1x128xf32>
    %78 = vector.extract_strided_slice %75 {offsets = [0, 0], sizes = [15, 128], strides = [1, 1]} : vector<16x128xf32> to vector<15x128xf32>
    %79 = tpu.concatenate %77, %78 in 0 : vector<1x128xf32>, vector<15x128xf32> -> vector<16x128xf32>
    %c16_i32_26 = arith.constant 16 : i32
    %80 = tpu.dynamic_rotate %79 by %c16_i32_26 dim 1 : vector<16x128xf32>, i32 -> vector<16x128xf32>
    %81 = arith.select %29, %76, %80 : vector<16x128xi1>, vector<16x128xf32>
    %cst_27 = arith.constant 0.000000e+00 : f32
    %82 = vector.broadcast %cst_27 : f32 to vector<16x128xf32>
    %83 = arith.select %17, %81, %82 : vector<16x128xi1>, vector<16x128xf32>
    %c1_i32_28 = arith.constant 1 : i32
    %84 = tpu.dynamic_rotate %75 by %c1_i32_28 dim 1 : vector<16x128xf32>, i32 -> vector<16x128xf32>
    %cst_29 = arith.constant 0.000000e+00 : f32
    %85 = vector.broadcast %cst_29 : f32 to vector<16x128xf32>
    %86 = arith.select %25, %84, %85 : vector<16x128xi1>, vector<16x128xf32>
    %c16_i32_30 = arith.constant 16 : i32
    %87 = tpu.dynamic_rotate %71 by %c16_i32_30 dim 1 : vector<16x128xf32>, i32 -> vector<16x128xf32>
    %cst_31 = arith.constant 0.000000e+00 : f32
    %88 = vector.broadcast %cst_31 : f32 to vector<1x128xf32>
    %89 = vector.extract_strided_slice %71 {offsets = [0, 0], sizes = [15, 128], strides = [1, 1]} : vector<16x128xf32> to vector<15x128xf32>
    %90 = tpu.concatenate %88, %89 in 0 : vector<1x128xf32>, vector<15x128xf32> -> vector<16x128xf32>
    %c16_i32_32 = arith.constant 16 : i32
    %91 = tpu.dynamic_rotate %90 by %c16_i32_32 dim 1 : vector<16x128xf32>, i32 -> vector<16x128xf32>
    %92 = arith.select %29, %87, %91 : vector<16x128xi1>, vector<16x128xf32>
    %cst_33 = arith.constant 0.000000e+00 : f32
    %93 = vector.broadcast %cst_33 : f32 to vector<16x128xf32>
    %94 = arith.select %17, %92, %93 : vector<16x128xi1>, vector<16x128xf32>
    %c1_i32_34 = arith.constant 1 : i32
    %95 = tpu.dynamic_rotate %71 by %c1_i32_34 dim 1 : vector<16x128xf32>, i32 -> vector<16x128xf32>
    %cst_35 = arith.constant 0.000000e+00 : f32
    %96 = vector.broadcast %cst_35 : f32 to vector<16x128xf32>
    %97 = arith.select %25, %95, %96 : vector<16x128xi1>, vector<16x128xf32>
    %98 = arith.mulf %75, %83 : vector<16x128xf32>
    %99 = arith.mulf %75, %86 : vector<16x128xf32>
    %100 = arith.addf %98, %99 : vector<16x128xf32>
    %101 = arith.subf %71, %94 : vector<16x128xf32>
    %102 = math.absf %101 : vector<16x128xf32>
    %103 = arith.mulf %102, %98 : vector<16x128xf32>
    %104 = arith.subf %71, %97 : vector<16x128xf32>
    %105 = math.absf %104 : vector<16x128xf32>
    %106 = arith.mulf %105, %99 : vector<16x128xf32>
    %107 = arith.addf %103, %106 : vector<16x128xf32>
    %cst_36 = arith.constant 0.000000e+00 : f32
    %108 = vector.broadcast %cst_36 : f32 to vector<1x128xf32>
    %109 = vector.shape_cast %42 : vector<16x128xf32> to vector<1x16x128xf32>
    %cst_37 = arith.constant dense<0.000000e+00> : vector<1xf32>
    %110 = vector.multi_reduction <add>, %109, %cst_37 [1, 2] : vector<1x16x128xf32> to vector<1xf32>
    %111 = vector.shape_cast %110 : vector<1xf32> to vector<1x1x1xf32>
    %112 = vector.extract %111[0, 0, 0] : f32 from vector<1x1x1xf32>
    %113 = vector.broadcast %112 : f32 to vector<1x128xf32>
    %114 = arith.addf %108, %113 : vector<1x128xf32>
    %115 = vector.shape_cast %68 : vector<16x128xf32> to vector<1x16x128xf32>
    %cst_38 = arith.constant dense<0.000000e+00> : vector<1xf32>
    %116 = vector.multi_reduction <add>, %115, %cst_38 [1, 2] : vector<1x16x128xf32> to vector<1xf32>
    %117 = vector.shape_cast %116 : vector<1xf32> to vector<1x1x1xf32>
    %118 = vector.extract %117[0, 0, 0] : f32 from vector<1x1x1xf32>
    %119 = vector.broadcast %118 : f32 to vector<1x128xf32>
    %120 = arith.addf %108, %119 : vector<1x128xf32>
    %121 = vector.shape_cast %100 : vector<16x128xf32> to vector<1x16x128xf32>
    %cst_39 = arith.constant dense<0.000000e+00> : vector<1xf32>
    %122 = vector.multi_reduction <add>, %121, %cst_39 [1, 2] : vector<1x16x128xf32> to vector<1xf32>
    %123 = vector.shape_cast %122 : vector<1xf32> to vector<1x1x1xf32>
    %124 = vector.extract %123[0, 0, 0] : f32 from vector<1x1x1xf32>
    %125 = vector.broadcast %124 : f32 to vector<1x128xf32>
    %126 = arith.addf %108, %125 : vector<1x128xf32>
    %127 = vector.shape_cast %107 : vector<16x128xf32> to vector<1x16x128xf32>
    %cst_40 = arith.constant dense<0.000000e+00> : vector<1xf32>
    %128 = vector.multi_reduction <add>, %127, %cst_40 [1, 2] : vector<1x16x128xf32> to vector<1xf32>
    %129 = vector.shape_cast %128 : vector<1xf32> to vector<1x1x1xf32>
    %130 = vector.extract %129[0, 0, 0] : f32 from vector<1x1x1xf32>
    %131 = vector.broadcast %130 : f32 to vector<1x128xf32>
    %132 = arith.addf %108, %131 : vector<1x128xf32>
    %133 = tpu.concatenate %114, %120, %126, %132 in 0 : vector<1x128xf32>, vector<1x128xf32>, vector<1x128xf32>, vector<1x128xf32> -> vector<4x128xf32>
    %c0_41 = arith.constant 0 : index
    %c0_42 = arith.constant 0 : index
    %c0_43 = arith.constant 0 : index
    %134 = vector.load %arg4[%c0_41, %c0_42, %c0_43] : memref<1x4x128xf32, #tpu.memory_space<vmem>>, vector<1x4x128xf32>
    %135 = vector.shape_cast %134 : vector<1x4x128xf32> to vector<4x128xf32>
    %136 = vector.shape_cast %133 : vector<4x128xf32> to vector<1x4x128xf32>
    tpu.vector_store %arg4[%c0_41, %c0_42, %c0_43], %136 {strides = array<i32>} : memref<1x4x128xf32, #tpu.memory_space<vmem>>, vector<1x4x128xf32>,
    return
  }
  func.func @transform_0(%arg0: i32) -> (i32, i32) {
    %c0_i32 = arith.constant 0 : i32
    %c0_i32_0 = arith.constant 0 : i32
    return %arg0, %c0_i32 : i32, i32
  }
  func.func @transform_1(%arg0: i32) -> (i32, i32) {
    %c0_i32 = arith.constant 0 : i32
    %c0_i32_0 = arith.constant 0 : i32
    return %arg0, %c0_i32 : i32, i32
  }
  func.func @transform_2(%arg0: i32) -> (i32, i32) {
    %c0_i32 = arith.constant 0 : i32
    %c0_i32_0 = arith.constant 0 : i32
    return %arg0, %c0_i32 : i32, i32
  }
  func.func @transform_3(%arg0: i32) -> (i32, i32, i32) {
    %c0_i32 = arith.constant 0 : i32
    %c0_i32_0 = arith.constant 0 : i32
    %c0_i32_1 = arith.constant 0 : i32
    return %arg0, %c0_i32, %c0_i32_0 : i32, i32, i32
  }
}

</mosaic_0001>

<llo_original>
// kernel: tpu_custom_call.1
$region0: #{tpu_custom_call.1}
  #allocation0 [shape = 'u32[]', space=smem, size = 0x4, offset = 0x4, fixed_abs, tag = 'smem constant byte address 0x4 - core index']
  #allocation1 [shape = 'u32[144,128]{1,0:T(1,128)}', space=vmem, size = 0x12000, scoped, tag = 'internal scratch']
  %s0 = inlined_call_operand.hbm [shape: f32[16,128], index: 0, kind: input, shape index: {}]
  %s1 = inlined_call_operand.hbm [shape: f32[16,128], index: 1, kind: input, shape index: {}]
  %s2 = inlined_call_operand.hbm [shape: bf16[16,128], index: 2, kind: input, shape index: {}]
  %s3 = inlined_call_operand.hbm [shape: f32[1,4,128], index: 3, kind: output, shape index: {}]
  %s4 = sld [smem:[#allocation0]]
  $region34: #{tpu_custom_call.1} parent=0
    _
  %s6 = ssub.s32 1, %s4
  %s7 = scalar_select 0, %s6, %s4
  $region1: #{tpu_custom_call.1} parent=0
    #allocation2 [shape = 'u8[8192]{0}', space=vmem, size = 0x2000, scoped, tag = 'input window, operand 0, single buffered']
    #allocation3 [shape = 's32[1]{0}', space=sflag, size = 0x4, scoped, tag = 'scoped memory for tpu_custom_call.1']
    #allocation4 [shape = 's32[1]{0}', space=sflag, size = 0x4, scoped, tag = 'scoped memory for tpu_custom_call.1']
    #allocation5 [shape = 'u8[8192]{0}', space=vmem, size = 0x2000, scoped, tag = 'input window, operand 1, single buffered']
    #allocation6 [shape = 's32[1]{0}', space=sflag, size = 0x4, scoped, tag = 'scoped memory for tpu_custom_call.1']
    #allocation7 [shape = 'u8[4096]{0}', space=vmem, size = 0x1000, scoped, tag = 'input window, operand 2, single buffered']
    #allocation8 [shape = 'u8[2048]{0}', space=vmem, size = 0x800, scoped, tag = 'output window, operand 0, single buffered']
    %8 = vsyncpa [#allocation3], 0
    %9 = vsyncpa [#allocation6], 0
    %10 = vsyncpa [#allocation4], 0
    // Predicated region
    $region2: #{tpu_custom_call.1} parent=1 // pred_check
      _
    $region3: #{tpu_custom_call.1} parent=1 // pred_check_branch
      %12 = sbr.rel (0) target = $region5
    $region4: #{tpu_custom_call.1} parent=1 // pred_region
      %s14 = ssub.s32 256, 256
      %15 = vsyncadd [#allocation3], %s14
      %s16 = sshll.u32 [#allocation2], 4
      %s17 = int_to_ptr.vmem [resolvable:$true] %s16
      %22 = dma.hbm_to_vmem [thread:$0]  %s0, 256, %s17, [#allocation3], 128, 128, 8
    $region5: #{tpu_custom_call.1} parent=1 // pred_fallthru
      _
    // Predicated region
    $region6: #{tpu_custom_call.1} parent=1 // pred_check
      _
    $region7: #{tpu_custom_call.1} parent=1 // pred_check_branch
      %24 = sbr.rel (0) target = $region9
    $region8: #{tpu_custom_call.1} parent=1 // pred_region
      %s26 = ssub.s32 256, 256
      %27 = vsyncadd [#allocation6], %s26
      %s28 = sshll.u32 [#allocation5], 4
      %s29 = int_to_ptr.vmem [resolvable:$true] %s28
      %34 = dma.hbm_to_vmem [thread:$0]  %s1, 256, %s29, [#allocation6], 128, 128, 8
    $region9: #{tpu_custom_call.1} parent=1 // pred_fallthru
      _
    // Predicated region
    $region10: #{tpu_custom_call.1} parent=1 // pred_check
      _
    $region11: #{tpu_custom_call.1} parent=1 // pred_check_branch
      %36 = sbr.rel (0) target = $region13
    $region12: #{tpu_custom_call.1} parent=1 // pred_region
      %s38 = ssub.s32 128, 128
      %39 = vsyncadd [#allocation6], %s38
      %s40 = sshll.u32 [#allocation7], 4
      %s41 = int_to_ptr.vmem [resolvable:$true] %s40
      %46 = dma.hbm_to_vmem [thread:$0]  %s2, 128, %s41, [#allocation6], 64, 64, 4
    $region13: #{tpu_custom_call.1} parent=1 // pred_fallthru
      _
    // Predicated region
    $region14: #{tpu_custom_call.1} parent=1 // pred_check
      _
    $region15: #{tpu_custom_call.1} parent=1 // pred_check_branch
      %48 = sbr.rel (0) target = $region17
    $region16: #{tpu_custom_call.1} parent=1 // pred_region
      %49 = dma.done [#allocation3], 256
    $region17: #{tpu_custom_call.1} parent=1 // pred_fallthru
      _
    // Predicated region
    $region18: #{tpu_custom_call.1} parent=1 // pred_check
      _
    $region19: #{tpu_custom_call.1} parent=1 // pred_check_branch
      %51 = sbr.rel (0) target = $region21
    $region20: #{tpu_custom_call.1} parent=1 // pred_region
      %52 = dma.done [#allocation6], 256
    $region21: #{tpu_custom_call.1} parent=1 // pred_fallthru
      _
    // Predicated region
    $region22: #{tpu_custom_call.1} parent=1 // pred_check
      _
    $region23: #{tpu_custom_call.1} parent=1 // pred_check_branch
      %54 = sbr.rel (0) target = $region25
    $region24: #{tpu_custom_call.1} parent=1 // pred_region
      %55 = dma.done [#allocation6], 128
    $region25: #{tpu_custom_call.1} parent=1 // pred_fallthru
      _
    %v56 = vld [vmem:[#allocation2] sm:$0xff]
    %v57 = vld [vmem:[#allocation2 + $0x8] sm:$0xff]
    %v58 = vld [vmem:[#allocation5] sm:$0xff]
    %v59 = vld [vmem:[#allocation5 + $0x8] sm:$0xff]
    %v60 = vld [vmem:[#allocation7] sm:$0xf]
    %v61 = vld [vmem:[#allocation7 + $0x4] sm:$0xf]
    %v62 = vunpack.c.l.bf16 %v60
    %v63 = vunpack.c.l.bf16 %v61
    %v64 = vlaneseq
    %v65 = vshrl.u32 %v64, 7
    %v66 = vadd.s32 %v65, 8
    %v67 = vlaneseq
    %v68 = vand.u32 %v67, 127
    %v69 = vand.u32 %v68, 15
    %v70 = vshra.s32 %v68, 4
    %v71 = vand.u32 %v65, 1
    %v72 = vand.u32 %v66, 1
    %vm73 = vcmp.eq.s32.totalorder %v71, 0
    %vm74 = vcmp.eq.s32.totalorder %v72, 0
    %vm75 = vcmp.eq.s32.totalorder %v70, 0
    %vm76 = vmand %vm73, %vm75
    %vm77 = vmand %vm74, %vm75
    %vm78 = vmxor %vm76, 1
    %vm79 = vmxor %vm77, 1
    %vm80 = vcmp.eq.s32.totalorder %v71, 1
    %vm81 = vcmp.eq.s32.totalorder %v72, 1
    %vm82 = vcmp.eq.s32.totalorder %v70, 7
    %vm83 = vmand %vm80, %vm82
    %vm84 = vmand %vm81, %vm82
    %vm85 = vmxor %vm83, 1
    %vm86 = vmxor %vm84, 1
    %vm87 = vcmp.ge.s32.totalorder %v69, 1
    %vm88 = vcmp.le.s32.totalorder %v69, 14
    %vm89 = vcmp.ge.s32.totalorder %v70, 1
    %vm90 = vcmp.le.s32.totalorder %v70, 6
    %vm91 = vcmp.eq.f32.partialorder %v58, -2.0
    %vm92 = vcmp.eq.f32.partialorder %v59, -2.0
    %v93 = vsel %vm91, 1, 0
    %v94 = vsel %vm92, 1, 0
    %v95 = vcvt.s32.f32 %v93
    %v96 = vcvt.s32.f32 %v94
    %v97 = vmax.f32 %v62, %v95
    %v98 = vmax.f32 %v63, %v96
    %v99 = vsub.f32 1.0, %v97
    %v100 = vsub.f32 1.0, %v98
    %v101 = vsub.f32 %v56, %v58
    %v102 = vsub.f32 %v57, %v59
    %v103 = vmul.f32 %v101, %v101
    %v104 = vmul.f32 %v102, %v102
    %v105 = vmul.f32 %v103, %v99
    %v106 = vmul.f32 %v104, %v100
    %107 = vrot.lane.b32.xlu0 %v99, 16
    %v108 = vpop.permute.xlu0 %107
    %109 = vrot.lane.b32.xlu0 %v100, 16
    %v110 = vpop.permute.xlu0 %109
    %vm113 = vcmask 1040384
    %v114 = vrot.slane %v99, 7
    %v115 = vrot.slane %v100, 7
    %v116 = vsel %vm113, %v114, %v115
    %v119 = vsel %vm113, 0.0, %v114
    %120 = vrot.lane.b32.xlu0 %v119, 16
    %v121 = vpop.permute.xlu0 %120
    %122 = vrot.lane.b32.xlu0 %v116, 16
    %v123 = vpop.permute.xlu0 %122
    %v124 = vsel %vm89, %v108, %v121
    %v125 = vsel %vm89, %v110, %v123
    %v126 = vsel %vm78, %v124, 0.0
    %v127 = vsel %vm79, %v125, 0.0
    %v128 = vmax.f32 %v99, %v126
    %v129 = vmax.f32 %v100, %v127
    %130 = vrot.lane.b32.xlu0 %v99, 112
    %v131 = vpop.permute.xlu0 %130
    %132 = vrot.lane.b32.xlu0 %v100, 112
    %v133 = vpop.permute.xlu0 %132
    %vm134 = vcmask 1046528
    %v135 = vrot.slane %v99, 1
    %v136 = vrot.slane %v100, 1
    %v137 = vsel %vm134, %v135, %v136
    %v140 = vsel %vm134, %v136, 0.0
    %141 = vrot.lane.b32.xlu0 %v137, 112
    %v142 = vpop.permute.xlu0 %141
    %143 = vrot.lane.b32.xlu0 %v140, 112
    %v144 = vpop.permute.xlu0 %143
    %v145 = vsel %vm90, %v131, %v142
    %v146 = vsel %vm90, %v133, %v144
    %v147 = vsel %vm85, %v145, 0.0
    %v148 = vsel %vm86, %v146, 0.0
    %v149 = vmax.f32 %v128, %v147
    %v150 = vmax.f32 %v129, %v148
    %151 = vrot.lane.b32.xlu0 %v149, 1
    %v152 = vpop.permute.xlu0 %151
    %153 = vrot.lane.b32.xlu0 %v150, 1
    %v154 = vpop.permute.xlu0 %153
    %v155 = vsel %vm87, %v152, 0.0
    %v156 = vsel %vm87, %v154, 0.0
    %v157 = vmax.f32 %v149, %v155
    %v158 = vmax.f32 %v150, %v156
    %159 = vrot.lane.b32.xlu0 %v149, 127
    %v160 = vpop.permute.xlu0 %159
    %161 = vrot.lane.b32.xlu0 %v150, 127
    %v162 = vpop.permute.xlu0 %161
    %v163 = vsel %vm88, %v160, 0.0
    %v164 = vsel %vm88, %v162, 0.0
    %v165 = vmax.f32 %v157, %v163
    %v166 = vmax.f32 %v158, %v164
    %vm167 = vcmp.gt.f32.partialorder %v165, 0.5
    %vm168 = vcmp.gt.f32.partialorder %v166, 0.5
    %v169 = vsel %vm167, %v56, %v58
    %v170 = vsel %vm168, %v57, %v59
    %vm171 = vcmp.eq.f32.partialorder %v56, -2.0
    %vm172 = vcmp.eq.f32.partialorder %v57, -2.0
    %v173 = vsel %vm171, 0.0, %v165
    %v174 = vsel %vm172, 0.0, %v166
    %175 = vrot.lane.b32.xlu0 %v173, 16
    %v176 = vpop.permute.xlu0 %175
    %177 = vrot.lane.b32.xlu0 %v174, 16
    %v178 = vpop.permute.xlu0 %177
    %v181 = vrot.slane %v173, 7
    %v182 = vrot.slane %v174, 7
    %v183 = vsel %vm113, %v181, %v182
    %v186 = vsel %vm113, 0.0, %v181
    %187 = vrot.lane.b32.xlu0 %v186, 16
    %v188 = vpop.permute.xlu0 %187
    %189 = vrot.lane.b32.xlu0 %v183, 16
    %v190 = vpop.permute.xlu0 %189
    %v191 = vsel %vm89, %v176, %v188
    %v192 = vsel %vm89, %v178, %v190
    %v193 = vsel %vm78, %v191, 0.0
    %v194 = vsel %vm79, %v192, 0.0
    %195 = vrot.lane.b32.xlu0 %v173, 1
    %v196 = vpop.permute.xlu0 %195
    %197 = vrot.lane.b32.xlu0 %v174, 1
    %v198 = vpop.permute.xlu0 %197
    %v199 = vsel %vm87, %v196, 0.0
    %v200 = vsel %vm87, %v198, 0.0
    %201 = vrot.lane.b32.xlu0 %v169, 16
    %v202 = vpop.permute.xlu0 %201
    %203 = vrot.lane.b32.xlu0 %v170, 16
    %v204 = vpop.permute.xlu0 %203
    %v207 = vrot.slane %v169, 7
    %v208 = vrot.slane %v170, 7
    %v209 = vsel %vm113, %v207, %v208
    %v212 = vsel %vm113, 0.0, %v207
    %213 = vrot.lane.b32.xlu0 %v212, 16
    %v214 = vpop.permute.xlu0 %213
    %215 = vrot.lane.b32.xlu0 %v209, 16
    %v216 = vpop.permute.xlu0 %215
    %v217 = vsel %vm89, %v202, %v214
    %v218 = vsel %vm89, %v204, %v216
    %v219 = vsel %vm78, %v217, 0.0
    %v220 = vsel %vm79, %v218, 0.0
    %221 = vrot.lane.b32.xlu0 %v169, 1
    %v222 = vpop.permute.xlu0 %221
    %223 = vrot.lane.b32.xlu0 %v170, 1
    %v224 = vpop.permute.xlu0 %223
    %v225 = vsel %vm87, %v222, 0.0
    %v226 = vsel %vm87, %v224, 0.0
    %v227 = vmul.f32 %v173, %v193
    %v228 = vmul.f32 %v174, %v194
    %v229 = vmul.f32 %v173, %v199
    %v230 = vmul.f32 %v174, %v200
    %v231 = vadd.f32 %v227, %v229
    %v232 = vadd.f32 %v228, %v230
    %v233 = vsub.f32 %v169, %v219
    %v234 = vsub.f32 %v170, %v220
    %v235 = vand.u32 2147483647, %v233
    %v236 = vand.u32 2147483647, %v234
    %v237 = vmul.f32 %v235, %v227
    %v238 = vmul.f32 %v236, %v228
    %v239 = vsub.f32 %v169, %v225
    %v240 = vsub.f32 %v170, %v226
    %v241 = vand.u32 2147483647, %v239
    %v242 = vand.u32 2147483647, %v240
    %v243 = vmul.f32 %v241, %v229
    %v244 = vmul.f32 %v242, %v230
    %v245 = vadd.f32 %v237, %v243
    %v246 = vadd.f32 %v238, %v244
    %v247 = vadd.f32 %v105, %v106
    %248 = vadd.xlane.f32.xlu0 %v247
    %v249 = vpop.xlane.xlu0 %248
    %v250 = vrot.slane %v249, 4
    %v251 = vadd.f32 %v249, %v250
    %v252 = vrot.slane %v251, 2
    %v253 = vadd.f32 %v251, %v252
    %v254 = vrot.slane %v253, 1
    %v255 = vadd.f32 %v253, %v254
    %s256 = vtos %v255
    %v257 = vstv %s256
    %v258 = vadd.f32 %v257, 0.0
    %v259 = vadd.f32 %v165, %v166
    %260 = vadd.xlane.f32.xlu0 %v259
    %v261 = vpop.xlane.xlu0 %260
    %v262 = vrot.slane %v261, 4
    %v263 = vadd.f32 %v261, %v262
    %v264 = vrot.slane %v263, 2
    %v265 = vadd.f32 %v263, %v264
    %v266 = vrot.slane %v265, 1
    %v267 = vadd.f32 %v265, %v266
    %s268 = vtos %v267
    %v269 = vstv %s268
    %v270 = vadd.f32 %v269, 0.0
    %v271 = vadd.f32 %v231, %v232
    %272 = vadd.xlane.f32.xlu0 %v271
    %v273 = vpop.xlane.xlu0 %272
    %v274 = vrot.slane %v273, 4
    %v275 = vadd.f32 %v273, %v274
    %v276 = vrot.slane %v275, 2
    %v277 = vadd.f32 %v275, %v276
    %v278 = vrot.slane %v277, 1
    %v279 = vadd.f32 %v277, %v278
    %s280 = vtos %v279
    %v281 = vstv %s280
    %v282 = vadd.f32 %v281, 0.0
    %v283 = vadd.f32 %v245, %v246
    %284 = vadd.xlane.f32.xlu0 %v283
    %v285 = vpop.xlane.xlu0 %284
    %v286 = vrot.slane %v285, 4
    %v287 = vadd.f32 %v285, %v286
    %v288 = vrot.slane %v287, 2
    %v289 = vadd.f32 %v287, %v288
    %v290 = vrot.slane %v289, 1
    %v291 = vadd.f32 %v289, %v290
    %s292 = vtos %v291
    %v293 = vstv %s292
    %v294 = vadd.f32 %v293, 0.0
    %v295 = vsel %vm113, %v258, %v270
    %vm296 = vcmask 1041408
    %v297 = vsel %vm296, %v295, %v282
    %vm298 = vcmask 1042432
    %v299 = vsel %vm298, %v297, %v294
    %300 = vst [vmem:[#allocation8] sm:$0xf] %v299
    // Predicated region
    $region26: #{tpu_custom_call.1} parent=1 // pred_check
      _
    $region27: #{tpu_custom_call.1} parent=1 // pred_check_branch
      %302 = sbr.rel (0) target = $region29
    $region28: #{tpu_custom_call.1} parent=1 // pred_region
      %s304 = ssub.s32 64, 64
      %305 = vsyncadd [#allocation4], %s304
      %s307 = sshll.u32 [#allocation8], 4
      %s308 = int_to_ptr.vmem [resolvable:$true] %s307
      %310 = dma.vmem_to_hbm [thread:$0]  %s308, 64, %s3, [#allocation4]
    $region29: #{tpu_custom_call.1} parent=1 // pred_fallthru
      _
    // Predicated region
    $region30: #{tpu_custom_call.1} parent=1 // pred_check
      _
    $region31: #{tpu_custom_call.1} parent=1 // pred_check_branch
      %312 = sbr.rel (0) target = $region33
    $region32: #{tpu_custom_call.1} parent=1 // pred_region
      %313 = dma.done [#allocation4], 64
    $region33: #{tpu_custom_call.1} parent=1 // pred_fallthru
      _
    %314 = vsyncpa [#allocation3], 1
    %315 = vsyncpa [#allocation6], 1
    %316 = vsyncpa [#allocation4], 1

</llo_original>
